<compile_context>
chip_gen: v6e
topology: v6e:2x2x1
jax: 0.10.0
libtpu: 0.0.40
codegen_flags: <defaults>
</compile_context>

<pallas_src>
import functools

import jax
import jax.numpy as jnp
import numpy as np
from jax import lax
from jax.experimental import pallas as pl
from jax.experimental.pallas import tpu as pltpu


# -----------------------------------------------------------------------------
# Shared helpers (traced inside kernels)
# -----------------------------------------------------------------------------
def _neg_inv_base_bw_const(fix_sigma, kernel_mul, kernel_num):
    bw0 = float(fix_sigma) / (kernel_mul ** (kernel_num // 2))
    return -1.0 / bw0


def _multi_scale_kernel(l2, neg_inv, kernel_mul, kernel_num):
    """sum_i exp(-l2 / (bw0 * mul^i)) with neg_inv = -1/bw0 (all f32 VPU/EUP)."""
    neg_scaled = l2 * neg_inv
    kern = jnp.exp(neg_scaled)
    for i in range(1, kernel_num):
        kern = kern + jnp.exp(neg_scaled * (kernel_mul ** float(-i)))
    return kern


# -----------------------------------------------------------------------------
# Fused single-block kernel (small n): one pallas_call does everything.
# -----------------------------------------------------------------------------
def _mmd_rbf_fused_kernel(src_ref, tgt_ref, out_ref, total_ref, *, batch,
                          kernel_mul, kernel_num, fix_sigma):
    n = 2 * batch
    d = src_ref.shape[1]

    # total = cat([source, target], 0), kept in the INPUT dtype for the MXU.
    total_ref[0:batch, :] = src_ref[...]
    total_ref[batch:n, :] = tgt_ref[...]
    total = total_ref[...]

    # Gram on the MXU; ||x_i - x_j||^2 = sq_i + sq_j - 2 * gram_ij.
    gram = lax.dot_general(total, total, (((1,), (1,)), ((), ())),
                           preferred_element_type=jnp.float32)       # (n, n)
    t32 = total.astype(jnp.float32)
    tsq = t32 * t32
    sq_row = jnp.sum(tsq, axis=1, keepdims=True)                     # (n, 1)
    ones_row = jnp.ones((1, d), jnp.float32)
    sq_col = lax.dot_general(ones_row, tsq, (((1,), (1,)), ((), ())),
                             preferred_element_type=jnp.float32)     # (1, n) no transpose
    l2 = jnp.maximum(sq_row + sq_col - 2.0 * gram, 0.0)              # (n, n)

    # Bandwidth: analytic sum(L2) = 2n*sum||x||^2 - 2*||sum x||^2  (O(nD)).
    if fix_sigma:
        neg_inv = jnp.full((1, 1),
                           _neg_inv_base_bw_const(fix_sigma, kernel_mul, kernel_num),
                           jnp.float32)
    else:
        s_tot = jnp.sum(sq_row, axis=0, keepdims=True)               # (1, 1)
        m = jnp.sum(t32, axis=0, keepdims=True)                      # (1, D)
        msq = jnp.sum(m * m, axis=1, keepdims=True)                  # (1, 1)
        sum_l2 = 2.0 * float(n) * s_tot - 2.0 * msq
        bw = sum_l2 * (1.0 / float(n * n - n))
        bw = bw * (1.0 / (kernel_mul ** (kernel_num // 2)))
        neg_inv = -1.0 / bw                 # no eps guard: matches torch exactly

    kern = _multi_scale_kernel(l2, neg_inv, kernel_mul, kernel_num)

    # mean(XX)+mean(YY)-mean(XY)-mean(YX) = sum(s_i s_j K_ij) / batch^2,
    # with s = +1 for source rows, -1 for target rows (tiny (n,1)/(1,n) iotas).
    sgn_r = jnp.where(lax.broadcasted_iota(jnp.int32, (n, 1), 0) < batch, 1.0, -1.0)
    sgn_c = jnp.where(lax.broadcasted_iota(jnp.int32, (1, n), 1) < batch, 1.0, -1.0)
    acc = jnp.sum((kern * sgn_c) * sgn_r, axis=1, keepdims=True)
    acc = jnp.sum(acc, axis=0, keepdims=True)                        # (1, 1)
    out_ref[...] = acc * (1.0 / float(batch * batch))


# -----------------------------------------------------------------------------
# Tiled kernel (large n): grid = (row_block, col_block), upper triangle only.
# -----------------------------------------------------------------------------
def _mmd_rbf_tiled_kernel(scale_ref, row_ref, col_ref, out_ref, *, batch, tile,
                          kernel_mul, kernel_num):
    i = pl.program_id(0)
    j = pl.program_id(1)

    @pl.when(j == 0)
    def _():
        out_ref[...] = jnp.zeros_like(out_ref)

    # K is symmetric: compute only j >= i tiles; double off-diagonal tiles.
    @pl.when(j >= i)
    def _():
        row = row_ref[...]
        col = col_ref[...]
        d = row.shape[1]

        gram = lax.dot_general(row, col, (((1,), (1,)), ((), ())),
                               preferred_element_type=jnp.float32)    # (T, T)
        r32 = row.astype(jnp.float32)
        c32 = col.astype(jnp.float32)
        sq_r = jnp.sum(r32 * r32, axis=1, keepdims=True)              # (T, 1)
        ones_row = jnp.ones((1, d), jnp.float32)
        sq_c = lax.dot_general(ones_row, c32 * c32, (((1,), (1,)), ((), ())),
                               preferred_element_type=jnp.float32)    # (1, T)
        l2 = jnp.maximum(sq_r + sq_c - 2.0 * gram, 0.0)

        neg_inv = scale_ref[...]                                      # (1, 1) = -1/bw0
        kern = _multi_scale_kernel(l2, neg_inv, kernel_mul, kernel_num)

        r0 = i * tile
        c0 = j * tile
        sgn_r = jnp.where(
            lax.broadcasted_iota(jnp.int32, (tile, 1), 0) + r0 < batch, 1.0, -1.0)
        sgn_c = jnp.where(
            lax.broadcasted_iota(jnp.int32, (1, tile), 1) + c0 < batch, 1.0, -1.0)
        part = jnp.sum((kern * sgn_c) * sgn_r, axis=1, keepdims=True)
        part = jnp.sum(part, axis=0, keepdims=True)                   # (1, 1)
        weight = jnp.where(j == i, 1.0, 2.0)
        out_ref[...] = out_ref[...] + weight * part                   # bcast (8,128)


def _mmd_linear_kernel(src_ref, tgt_ref, out_ref):
    """linear_mmd2: ||mean(source) - mean(target)||^2."""
    delta = (jnp.mean(src_ref[...].astype(jnp.float32), axis=0, keepdims=True)
             - jnp.mean(tgt_ref[...].astype(jnp.float32), axis=0, keepdims=True))
    out_ref[...] = jnp.sum(delta * delta, axis=1, keepdims=True)      # (1, 1)


# -----------------------------------------------------------------------------
# Wrappers (mirror MMDLoss.forward)
# -----------------------------------------------------------------------------
def _rbf_fast(source, target, kernel_mul, kernel_num, fix_sigma):
    b, d = source.shape
    kernel = functools.partial(_mmd_rbf_fused_kernel, batch=b,
                               kernel_mul=kernel_mul, kernel_num=kernel_num,
                               fix_sigma=fix_sigma)
    out = pl.pallas_call(
        kernel,
        out_shape=jax.ShapeDtypeStruct((1, 1), jnp.float32),
        grid=(1,),
        in_specs=[pl.BlockSpec((b, d), lambda i: (0, 0)),
                  pl.BlockSpec((b, d), lambda i: (0, 0))],
        out_specs=pl.BlockSpec((1, 1), lambda i: (0, 0)),
        scratch_shapes=[pltpu.VMEM((2 * b, d), source.dtype)],
        compiler_params=pltpu.CompilerParams(
            dimension_semantics=("arbitrary",),
            vmem_limit_bytes=48 * 1024 * 1024),
    )(source, target)
    return out[0, 0]


def _rbf_tiled(source, target, kernel_mul, kernel_num, fix_sigma, tile):
    b, d = source.shape
    n = 2 * b
    r = n // tile
    # Concat once in HBM; data stays in the input dtype for the MXU Gram.
    total = jnp.concatenate([source, target], axis=0)

    # Analytic base bandwidth (O(nD) reduce) -> single scalar fed to the kernel.
    if fix_sigma:
        neg_inv = jnp.full((1, 1),
                           _neg_inv_base_bw_const(fix_sigma, kernel_mul, kernel_num),
                           jnp.float32)
    else:
        t32 = total.astype(jnp.float32)
        sum_sq = jnp.sum(t32 * t32)
        col_sum = jnp.sum(t32, axis=0)
        sum_l2 = 2.0 * n * sum_sq - 2.0 * jnp.sum(col_sum * col_sum)
        bw = sum_l2 / float(n * n - n)
        bw = bw / (kernel_mul ** (kernel_num // 2))
        neg_inv = (-1.0 / bw).reshape(1, 1).astype(jnp.float32)

    kernel = functools.partial(_mmd_rbf_tiled_kernel, batch=b, tile=tile,
                               kernel_mul=kernel_mul, kernel_num=kernel_num)
    out = pl.pallas_call(
        kernel,
        out_shape=jax.ShapeDtypeStruct((8 * r, 128), jnp.float32),
        grid=(r, r),
        in_specs=[
            pl.BlockSpec((1, 1), lambda i, j: (0, 0)),                     # -1/bw0
            pl.BlockSpec((tile, d), lambda i, j: (i, 0)),                  # row tile (held across j)
            pl.BlockSpec((tile, d), lambda i, j: (jnp.maximum(i, j), 0)),  # col tile (no DMA for skipped j<i)
        ],
        out_specs=pl.BlockSpec((8, 128), lambda i, j: (i, 0)),             # per-row-block partial
        compiler_params=pltpu.CompilerParams(
            dimension_semantics=("parallel", "arbitrary"),                 # v7x: both TCs
            vmem_limit_bytes=48 * 1024 * 1024),
    )(neg_inv, total, total)
    return jnp.sum(out[::8, 0]) / float(b * b)


def mmd_loss(source, target, kernel_type='rbf', kernel_mul=2.0,
             kernel_num=5, fix_sigma=None, _tile=None):
    b, d = source.shape
    assert target.shape == (b, d), "kernel assumes equal source/target batch"
    if kernel_type == 'linear':
        out = pl.pallas_call(
            _mmd_linear_kernel,
            out_shape=jax.ShapeDtypeStruct((1, 1), jnp.float32),
            grid=(1,),
            in_specs=[pl.BlockSpec((b, d), lambda i: (0, 0)),
                      pl.BlockSpec((b, d), lambda i: (0, 0))],
            out_specs=pl.BlockSpec((1, 1), lambda i: (0, 0)),
            compiler_params=pltpu.CompilerParams(
                dimension_semantics=("arbitrary",)),
        )(source, target)
        return out[0, 0]
    if kernel_type != 'rbf':
        raise ValueError(f"unknown kernel_type: {kernel_type}")

    n = 2 * b
    tile = _tile
    if tile is None and n > 512:
        for t in (512, 256, 128):
            if n % t == 0:
                tile = t
                break
        # TODO(synk): pad/mask variant of the tiled kernel for large n not
        # divisible by 128; such sizes fall back to the fused single-block path.
    if tile is not None:
        assert n % tile == 0
        return _rbf_tiled(source, target, kernel_mul, kernel_num, fix_sigma, tile)
    return _rbf_fast(source, target, kernel_mul, kernel_num, fix_sigma)


# -----------------------------------------------------------------------------
# Pure-JAX reference (mirrors the torch code literally) for correctness check
# -----------------------------------------------------------------------------
def mmd_loss_reference(source, target, kernel_type='rbf', kernel_mul=2.0,
                       kernel_num=5, fix_sigma=None):
    if kernel_type == 'linear':
        delta = source.mean(0) - target.mean(0)
        return jnp.dot(delta, delta)
    b = source.shape[0]
    total = jnp.concatenate([source, target], axis=0)
    n = total.shape[0]
    t0 = total[None, :, :]
    t1 = total[:, None, :]
    l2 = jnp.sum((t0 - t1) ** 2, axis=2)
    if fix_sigma:
        bandwidth = fix_sigma
    else:
        bandwidth = jnp.sum(l2) / (n * n - n)
    bandwidth = bandwidth / (kernel_mul ** (kernel_num // 2))
    kernels = sum(jnp.exp(-l2 / (bandwidth * kernel_mul ** i))
                  for i in range(kernel_num))
    xx = jnp.mean(kernels[:b, :b])
    yy = jnp.mean(kernels[b:, b:])
    xy = jnp.mean(kernels[:b, b:])
    yx = jnp.mean(kernels[b:, :b])
    return xx + yy - xy - yx


# -----------------------------------------------------------------------------
if __name__ == "__main__":
    key = jax.random.PRNGKey(0)
    k1, k2, k3, k4 = jax.random.split(key, 4)

    # Small shapes -> fused single-block fast path (default rbf + linear).
    B, D = 8, 128
    source = jax.random.normal(k1, (B, D), jnp.float32)
    target = 0.5 * jax.random.normal(k2, (B, D), jnp.float32) + 0.25

    loss_rbf = jax.block_until_ready(mmd_loss(source, target, 'rbf'))
    ref_rbf = mmd_loss_reference(source, target, 'rbf')
    np.testing.assert_allclose(np.asarray(loss_rbf), np.asarray(ref_rbf),
                               rtol=1e-3, atol=1e-5)

    loss_lin = jax.block_until_ready(mmd_loss(source, target, 'linear'))
    ref_lin = mmd_loss_reference(source, target, 'linear')
    np.testing.assert_allclose(np.asarray(loss_lin), np.asarray(ref_lin),
                               rtol=1e-3, atol=1e-5)

    # Larger batch exercising the tiled / symmetric / megacore path (tile forced
    # small so the pure-JAX reference stays cheap; b=192 straddles a tile).
    B2, D2 = 192, 128
    src2 = jax.random.normal(k3, (B2, D2), jnp.float32)
    tgt2 = 0.5 * jax.random.normal(k4, (B2, D2), jnp.float32) + 0.25
    loss_tiled = jax.block_until_ready(mmd_loss(src2, tgt2, 'rbf', _tile=128))
    ref_tiled = mmd_loss_reference(src2, tgt2, 'rbf')
    np.testing.assert_allclose(np.asarray(loss_tiled), np.asarray(ref_tiled),
                               rtol=1e-3, atol=1e-5)

    print("KERNEL_OK")
</pallas_src>

<mosaic_0001>
module attributes {stable_mosaic.version = 11 : i64} {
  func.func @_mmd_rbf_fused_kernel(%arg0: i32, %arg1: memref<8x128xf32, #tpu.memory_space<vmem>>, %arg2: memref<8x128xf32, #tpu.memory_space<vmem>>, %arg3: memref<1x1xf32, #tpu.memory_space<vmem>>, %arg4: memref<16x128xf32, #tpu.memory_space<vmem>>) attributes {dimension_semantics = [#tpu.dimension_semantics<arbitrary>], iteration_bounds = array<i64: 1>, scalar_prefetch = 0 : i64, scratch_operands = 1 : i64, tpu.core_type = #tpu.core_type<tc>, window_params = [{pipeline_mode = #tpu.pipeline_mode<synchronous>, transform_indices = @transform_0, window_bounds = array<i64: 8, 128>}, {pipeline_mode = #tpu.pipeline_mode<synchronous>, transform_indices = @transform_1, window_bounds = array<i64: 8, 128>}, {pipeline_mode = #tpu.pipeline_mode<synchronous>, transform_indices = @transform_2, window_bounds = array<i64: 1, 1>}]} {
    %c0 = arith.constant 0 : index
    %c0_0 = arith.constant 0 : index
    %0 = vector.load %arg1[%c0, %c0_0] : memref<8x128xf32, #tpu.memory_space<vmem>>, vector<8x128xf32>
    %c0_1 = arith.constant 0 : index
    %c0_2 = arith.constant 0 : index
    %1 = vector.load %arg4[%c0_1, %c0_2] : memref<16x128xf32, #tpu.memory_space<vmem>>, vector<8x128xf32>
    tpu.vector_store %arg4[%c0_1, %c0_2], %0 {strides = array<i32>} : memref<16x128xf32, #tpu.memory_space<vmem>>, vector<8x128xf32>,
    %c0_3 = arith.constant 0 : index
    %c0_4 = arith.constant 0 : index
    %2 = vector.load %arg2[%c0_3, %c0_4] : memref<8x128xf32, #tpu.memory_space<vmem>>, vector<8x128xf32>
    %c8 = arith.constant 8 : index
    %c0_5 = arith.constant 0 : index
    %3 = vector.load %arg4[%c8, %c0_5] : memref<16x128xf32, #tpu.memory_space<vmem>>, vector<8x128xf32>
    tpu.vector_store %arg4[%c8, %c0_5], %2 {strides = array<i32>} : memref<16x128xf32, #tpu.memory_space<vmem>>, vector<8x128xf32>,
    %c0_6 = arith.constant 0 : index
    %c0_7 = arith.constant 0 : index
    %4 = vector.load %arg4[%c0_6, %c0_7] : memref<16x128xf32, #tpu.memory_space<vmem>>, vector<16x128xf32>
    %cst = arith.constant dense<0.000000e+00> : vector<16x16xf32>
    %5 = tpu.matmul %4, %4, %cst {dimension_numbers = #tpu.dot_dimension_numbers<[1], [1], [0], [0], [0, 0, 1, 0], [], []>} : vector<16x128xf32>, vector<16x128xf32>, vector<16x16xf32> -> vector<16x16xf32>
    %6 = arith.mulf %4, %4 : vector<16x128xf32>
    %cst_8 = arith.constant dense<0.000000e+00> : vector<16xf32>
    %7 = vector.multi_reduction <add>, %6, %cst_8 [1] : vector<16x128xf32> to vector<16xf32>
    %8 = vector.shape_cast %7 : vector<16xf32> to vector<16x1xf32>
    %cst_9 = arith.constant 1.000000e+00 : f32
    %9 = vector.broadcast %cst_9 : f32 to vector<1x128xf32>
    %cst_10 = arith.constant dense<0.000000e+00> : vector<1x16xf32>
    %10 = tpu.matmul %9, %6, %cst_10 {dimension_numbers = #tpu.dot_dimension_numbers<[1], [1], [0], [0], [0, 0, 1, 0], [], []>} : vector<1x128xf32>, vector<16x128xf32>, vector<1x16xf32> -> vector<1x16xf32>
    %11 = vector.broadcast %8 : vector<16x1xf32> to vector<16x16xf32>
    %12 = vector.broadcast %10 : vector<1x16xf32> to vector<16x16xf32>
    %13 = arith.addf %11, %12 : vector<16x16xf32>
    %cst_11 = arith.constant 2.000000e+00 : f32
    %14 = vector.broadcast %cst_11 : f32 to vector<16x16xf32>
    %15 = arith.mulf %14, %5 : vector<16x16xf32>
    %16 = arith.subf %13, %15 : vector<16x16xf32>
    %cst_12 = arith.constant 0.000000e+00 : f32
    %17 = vector.broadcast %cst_12 : f32 to vector<16x16xf32>
    %18 = arith.maximumf %16, %17 : vector<16x16xf32>
    %cst_13 = arith.constant dense<0.000000e+00> : vector<1xf32>
    %19 = vector.multi_reduction <add>, %8, %cst_13 [0] : vector<16x1xf32> to vector<1xf32>
    %20 = vector.shape_cast %19 : vector<1xf32> to vector<1x1xf32>
    %cst_14 = arith.constant dense<0.000000e+00> : vector<128xf32>
    %21 = vector.multi_reduction <add>, %4, %cst_14 [0] : vector<16x128xf32> to vector<128xf32>
    %22 = vector.shape_cast %21 : vector<128xf32> to vector<1x128xf32>
    %23 = arith.mulf %22, %22 : vector<1x128xf32>
    %cst_15 = arith.constant dense<0.000000e+00> : vector<1xf32>
    %24 = vector.multi_reduction <add>, %23, %cst_15 [1] : vector<1x128xf32> to vector<1xf32>
    %25 = vector.shape_cast %24 : vector<1xf32> to vector<1x1xf32>
    %cst_16 = arith.constant 3.200000e+01 : f32
    %26 = vector.broadcast %cst_16 : f32 to vector<1x1xf32>
    %27 = arith.mulf %26, %20 : vector<1x1xf32>
    %cst_17 = arith.constant 2.000000e+00 : f32
    %28 = vector.broadcast %cst_17 : f32 to vector<1x1xf32>
    %29 = arith.mulf %28, %25 : vector<1x1xf32>
    %30 = arith.subf %27, %29 : vector<1x1xf32>
    %cst_18 = arith.constant 0.00416666688 : f32
    %31 = vector.broadcast %cst_18 : f32 to vector<1x1xf32>
    %32 = arith.mulf %30, %31 : vector<1x1xf32>
    %cst_19 = arith.constant 2.500000e-01 : f32
    %33 = vector.broadcast %cst_19 : f32 to vector<1x1xf32>
    %34 = arith.mulf %32, %33 : vector<1x1xf32>
    %cst_20 = arith.constant -1.000000e+00 : f32
    %35 = vector.broadcast %cst_20 : f32 to vector<1x1xf32>
    %36 = arith.divf %35, %34 : vector<1x1xf32>
    %37 = vector.broadcast %36 : vector<1x1xf32> to vector<16x16xf32>
    %38 = arith.mulf %18, %37 : vector<16x16xf32>
    %39 = math.exp %38 : vector<16x16xf32>
    %cst_21 = arith.constant 5.000000e-01 : f32
    %40 = vector.broadcast %cst_21 : f32 to vector<16x16xf32>
    %41 = arith.mulf %38, %40 : vector<16x16xf32>
    %42 = math.exp %41 : vector<16x16xf32>
    %43 = arith.addf %39, %42 : vector<16x16xf32>
    %cst_22 = arith.constant 2.500000e-01 : f32
    %44 = vector.broadcast %cst_22 : f32 to vector<16x16xf32>
    %45 = arith.mulf %38, %44 : vector<16x16xf32>
    %46 = math.exp %45 : vector<16x16xf32>
    %47 = arith.addf %43, %46 : vector<16x16xf32>
    %cst_23 = arith.constant 1.250000e-01 : f32
    %48 = vector.broadcast %cst_23 : f32 to vector<16x16xf32>
    %49 = arith.mulf %38, %48 : vector<16x16xf32>
    %50 = math.exp %49 : vector<16x16xf32>
    %51 = arith.addf %47, %50 : vector<16x16xf32>
    %cst_24 = arith.constant 6.250000e-02 : f32
    %52 = vector.broadcast %cst_24 : f32 to vector<16x16xf32>
    %53 = arith.mulf %38, %52 : vector<16x16xf32>
    %54 = math.exp %53 : vector<16x16xf32>
    %55 = arith.addf %51, %54 : vector<16x16xf32>
    %56 = tpu.iota {dimensions = array<i32: 0>} : vector<16x1xi32>
    %c8_i32 = arith.constant 8 : i32
    %57 = vector.broadcast %c8_i32 : i32 to vector<16x1xi32>
    %58 = arith.cmpi slt, %56, %57 : vector<16x1xi32>
    %cst_25 = arith.constant 1.000000e+00 : f32
    %cst_26 = arith.constant -1.000000e+00 : f32
    %59 = vector.broadcast %cst_25 : f32 to vector<16x1xf32>
    %60 = vector.broadcast %cst_26 : f32 to vector<16x1xf32>
    %61 = arith.select %58, %59, %60 : vector<16x1xi1>, vector<16x1xf32>
    %62 = tpu.iota {dimensions = array<i32: 1>} : vector<1x16xi32>
    %c8_i32_27 = arith.constant 8 : i32
    %63 = vector.broadcast %c8_i32_27 : i32 to vector<1x16xi32>
    %64 = arith.cmpi slt, %62, %63 : vector<1x16xi32>
    %cst_28 = arith.constant 1.000000e+00 : f32
    %cst_29 = arith.constant -1.000000e+00 : f32
    %65 = vector.broadcast %cst_28 : f32 to vector<1x16xf32>
    %66 = vector.broadcast %cst_29 : f32 to vector<1x16xf32>
    %67 = arith.select %64, %65, %66 : vector<1x16xi1>, vector<1x16xf32>
    %68 = vector.broadcast %67 : vector<1x16xf32> to vector<16x16xf32>
    %69 = arith.mulf %55, %68 : vector<16x16xf32>
    %70 = vector.broadcast %61 : vector<16x1xf32> to vector<16x16xf32>
    %71 = arith.mulf %69, %70 : vector<16x16xf32>
    %cst_30 = arith.constant dense<0.000000e+00> : vector<16xf32>
    %72 = vector.multi_reduction <add>, %71, %cst_30 [1] : vector<16x16xf32> to vector<16xf32>
    %73 = vector.shape_cast %72 : vector<16xf32> to vector<16x1xf32>
    %cst_31 = arith.constant dense<0.000000e+00> : vector<1xf32>
    %74 = vector.multi_reduction <add>, %73, %cst_31 [0] : vector<16x1xf32> to vector<1xf32>
    %75 = vector.shape_cast %74 : vector<1xf32> to vector<1x1xf32>
    %cst_32 = arith.constant 1.562500e-02 : f32
    %76 = vector.broadcast %cst_32 : f32 to vector<1x1xf32>
    %77 = arith.mulf %75, %76 : vector<1x1xf32>
    %c0_33 = arith.constant 0 : index
    %c0_34 = arith.constant 0 : index
    %78 = vector.load %arg3[%c0_33, %c0_34] : memref<1x1xf32, #tpu.memory_space<vmem>>, vector<1x1xf32>
    tpu.vector_store %arg3[%c0_33, %c0_34], %77 {strides = array<i32>} : memref<1x1xf32, #tpu.memory_space<vmem>>, vector<1x1xf32>,
    return
  }
  func.func @transform_0(%arg0: i32) -> (i32, i32) {
    %c0_i32 = arith.constant 0 : i32
    %c0_i32_0 = arith.constant 0 : i32
    %c0_i32_1 = arith.constant 0 : i32
    return %c0_i32, %c0_i32_0 : i32, i32
  }
  func.func @transform_1(%arg0: i32) -> (i32, i32) {
    %c0_i32 = arith.constant 0 : i32
    %c0_i32_0 = arith.constant 0 : i32
    %c0_i32_1 = arith.constant 0 : i32
    return %c0_i32, %c0_i32_0 : i32, i32
  }
  func.func @transform_2(%arg0: i32) -> (i32, i32) {
    %c0_i32 = arith.constant 0 : i32
    %c0_i32_0 = arith.constant 0 : i32
    %c0_i32_1 = arith.constant 0 : i32
    return %c0_i32, %c0_i32_0 : i32, i32
  }
}

</mosaic_0001>

<llo_original>
// kernel: tpu_custom_call.1
$region0: #{tpu_custom_call.1}
  #allocation0 [shape = 'u32[]', space=smem, size = 0x4, offset = 0x4, fixed_abs, tag = 'smem constant byte address 0x4 - core index']
  #allocation1 [shape = 'u32[144,128]{1,0:T(1,128)}', space=vmem, size = 0x12000, scoped, tag = 'internal scratch']
  #allocation2 [shape = 'f32[16,128]{1,0:T(8,128)}', space=vmem, size = 0x2000, scoped, tag = 'scratch operand']
  %s0 = inlined_call_operand.hbm [shape: f32[8,128], index: 0, kind: input, shape index: {}]
  %s1 = inlined_call_operand.hbm [shape: f32[8,128], index: 1, kind: input, shape index: {}]
  %s2 = inlined_call_operand.hbm [shape: f32[1,1], index: 2, kind: output, shape index: {}]
  %s3 = sld [smem:[#allocation0]]
  $region26: #{tpu_custom_call.1} parent=0
    _
  %s5 = ssub.s32 1, %s3
  %s6 = scalar_select 0, %s5, %s3
  $region1: #{tpu_custom_call.1} parent=0
    #allocation3 [shape = 'u8[4096]{0}', space=vmem, size = 0x1000, scoped, tag = 'input window, operand 0, single buffered']
    #allocation4 [shape = 's32[1]{0}', space=sflag, size = 0x4, scoped, tag = 'scoped memory for tpu_custom_call.1']
    #allocation5 [shape = 's32[1]{0}', space=sflag, size = 0x4, scoped, tag = 'scoped memory for tpu_custom_call.1']
    #allocation6 [shape = 'u8[4096]{0}', space=vmem, size = 0x1000, scoped, tag = 'input window, operand 1, single buffered']
    #allocation7 [shape = 's32[1]{0}', space=sflag, size = 0x4, scoped, tag = 'scoped memory for tpu_custom_call.1']
    #allocation8 [shape = 'u8[512]{0}', space=vmem, size = 0x400, scoped, tag = 'output window, operand 0, single buffered']
    %7 = vsyncpa [#allocation4], 0
    %8 = vsyncpa [#allocation7], 0
    %9 = vsyncpa [#allocation5], 0
    // Predicated region
    $region2: #{tpu_custom_call.1} parent=1 // pred_check
      _
    $region3: #{tpu_custom_call.1} parent=1 // pred_check_branch
      %11 = sbr.rel (0) target = $region5
    $region4: #{tpu_custom_call.1} parent=1 // pred_region
      %s13 = ssub.s32 128, 128
      %14 = vsyncadd [#allocation4], %s13
      %s16 = sshll.u32 [#allocation3], 4
      %s17 = int_to_ptr.vmem [resolvable:$true] %s16
      %19 = dma.hbm_to_vmem [thread:$0]  %s0, 128, %s17, [#allocation4]
    $region5: #{tpu_custom_call.1} parent=1 // pred_fallthru
      _
    // Predicated region
    $region6: #{tpu_custom_call.1} parent=1 // pred_check
      _
    $region7: #{tpu_custom_call.1} parent=1 // pred_check_branch
      %21 = sbr.rel (0) target = $region9
    $region8: #{tpu_custom_call.1} parent=1 // pred_region
      %s23 = ssub.s32 128, 128
      %24 = vsyncadd [#allocation7], %s23
      %s26 = sshll.u32 [#allocation6], 4
      %s27 = int_to_ptr.vmem [resolvable:$true] %s26
      %29 = dma.hbm_to_vmem [thread:$0]  %s1, 128, %s27, [#allocation7]
    $region9: #{tpu_custom_call.1} parent=1 // pred_fallthru
      _
    // Predicated region
    $region10: #{tpu_custom_call.1} parent=1 // pred_check
      _
    $region11: #{tpu_custom_call.1} parent=1 // pred_check_branch
      %31 = sbr.rel (0) target = $region13
    $region12: #{tpu_custom_call.1} parent=1 // pred_region
      %32 = dma.done [#allocation4], 128
    $region13: #{tpu_custom_call.1} parent=1 // pred_fallthru
      _
    // Predicated region
    $region14: #{tpu_custom_call.1} parent=1 // pred_check
      _
    $region15: #{tpu_custom_call.1} parent=1 // pred_check_branch
      %34 = sbr.rel (0) target = $region17
    $region16: #{tpu_custom_call.1} parent=1 // pred_region
      %35 = dma.done [#allocation7], 128
    $region17: #{tpu_custom_call.1} parent=1 // pred_fallthru
      _
    %v36 = vld [vmem:[#allocation3] sm:$0xff]
    %37 = vst [vmem:[#allocation2] sm:$0xff] %v36
    %v38 = vld [vmem:[#allocation6] sm:$0xff]
    %39 = vst [vmem:[#allocation2 + $0x8] sm:$0xff] %v38
    %v40 = vld [vmem:[#allocation2] sm:$0xff]
    %v41 = vld [vmem:[#allocation2 + $0x8] sm:$0xff]
    %42 = vmatprep.subr.mxu0 0.0
    %43 = vmatpush1.xpose.msra.mxu0 0.0
    %44 = vmatprep.subr.mxu0 0.0
    %45 = vmatpush1.xpose.msra.mxu0 0.0
    %46 = vmatprep.subr.mxu0 0.0
    %47 = vmatpush1.xpose.msra.mxu0 0.0
    %48 = vmatprep.subr.mxu0 0.0
    %49 = vmatpush1.xpose.msra.mxu0 0.0
    %50 = vmatprep.subr.mxu0 0.0
    %51 = vmatpush1.xpose.msra.mxu0 0.0
    %52 = vmatprep.subr.mxu0 0.0
    %53 = vmatpush1.xpose.msra.mxu0 0.0
    %54 = vmatprep.subr.mxu0 0.0
    %55 = vmatpush1.xpose.msra.mxu0 0.0
    %56 = vmatprep.subr.mxu0 0.0
    %57 = vmatpush1.xpose.msra.mxu0 0.0
    %58 = vmatprep.subr.mxu0 0.0
    %59 = vmatpush1.xpose.msra.mxu0 0.0
    %60 = vmatprep.subr.mxu0 0.0
    %61 = vmatpush1.xpose.msra.mxu0 0.0
    %62 = vmatprep.subr.mxu0 0.0
    %63 = vmatpush1.xpose.msra.mxu0 0.0
    %64 = vmatprep.subr.mxu0 0.0
    %65 = vmatpush1.xpose.msra.mxu0 0.0
    %66 = vmatprep.subr.mxu0 0.0
    %67 = vmatpush1.xpose.msra.mxu0 0.0
    %68 = vmatprep.subr.mxu0 0.0
    %69 = vmatpush1.xpose.msra.mxu0 0.0
    %70 = vmatprep.subr.mxu0 0.0
    %71 = vmatpush1.xpose.msra.mxu0 %v41
    %72 = vmatprep.subr.mxu0 0.0
    %73 = vmatpush1.xpose.msra.mxu0 %v40
    %74 = vmatprep.subr.mxu0 0.0
    %75 = vmatpush2.xpose.msra.mxu0 0.0
    %76 = vmatprep.subr.mxu0 0.0
    %77 = vmatpush2.xpose.msra.mxu0 0.0
    %78 = vmatprep.subr.mxu0 0.0
    %79 = vmatpush2.xpose.msra.mxu0 0.0
    %80 = vmatprep.subr.mxu0 0.0
    %81 = vmatpush2.xpose.msra.mxu0 0.0
    %82 = vmatprep.subr.mxu0 0.0
    %83 = vmatpush2.xpose.msra.mxu0 0.0
    %84 = vmatprep.subr.mxu0 0.0
    %85 = vmatpush2.xpose.msra.mxu0 0.0
    %86 = vmatprep.subr.mxu0 0.0
    %87 = vmatpush2.xpose.msra.mxu0 0.0
    %88 = vmatprep.subr.mxu0 0.0
    %89 = vmatpush2.xpose.msra.mxu0 0.0
    %90 = vmatprep.subr.mxu0 0.0
    %91 = vmatpush2.xpose.msra.mxu0 0.0
    %92 = vmatprep.subr.mxu0 0.0
    %93 = vmatpush2.xpose.msra.mxu0 0.0
    %94 = vmatprep.subr.mxu0 0.0
    %95 = vmatpush2.xpose.msra.mxu0 0.0
    %96 = vmatprep.subr.mxu0 0.0
    %97 = vmatpush2.xpose.msra.mxu0 0.0
    %98 = vmatprep.subr.mxu0 0.0
    %99 = vmatpush2.xpose.msra.mxu0 0.0
    %100 = vmatprep.subr.mxu0 0.0
    %101 = vmatpush2.xpose.msra.mxu0 0.0
    %102 = vmatprep.subr.mxu0 0.0
    %103 = vmatpush2.xpose.msra.mxu0 0.0
    %104 = vmatprep.subr.mxu0 0.0
    %105 = vmatpush2.xpose.msra.mxu0 0.0
    %106 = vmatprep.mubr.f32.mxu0 0.0
    %107 = vmatmul.mubr.f32.gmra.mxu0 %v40
    %v108 = vpop.f32.mrf.mxu0
    %v109 = vadd.f32 0.0, %v108
    %v110 = vpop.f32.mrf.mxu0
    %111 = vmatprep.mubr.f32.mxu0 0.0
    %112 = vmatmul.mubr.f32.gmra.mxu0 %v41
    %v113 = vpop.f32.mrf.mxu0
    %v114 = vadd.f32 0.0, %v113
    %v115 = vpop.f32.mrf.mxu0
    %116 = vdwg.mxu0
    %v117 = vmul.f32 %v40, %v40
    %v118 = vmul.f32 %v41, %v41
    %119 = vadd.xlane.f32.xlu0 %v117
    %v120 = vpop.xlane.xlu0 %119
    %121 = vadd.xlane.f32.xlu0 %v118
    %v122 = vpop.xlane.xlu0 %121
    %123 = vmatprep.subr.mxu0 0.0
    %124 = vmatpush1.xpose.msra.mxu0 0.0
    %125 = vmatprep.subr.mxu0 0.0
    %126 = vmatpush1.xpose.msra.mxu0 0.0
    %127 = vmatprep.subr.mxu0 0.0
    %128 = vmatpush1.xpose.msra.mxu0 0.0
    %129 = vmatprep.subr.mxu0 0.0
    %130 = vmatpush1.xpose.msra.mxu0 0.0
    %131 = vmatprep.subr.mxu0 0.0
    %132 = vmatpush1.xpose.msra.mxu0 0.0
    %133 = vmatprep.subr.mxu0 0.0
    %134 = vmatpush1.xpose.msra.mxu0 0.0
    %135 = vmatprep.subr.mxu0 0.0
    %136 = vmatpush1.xpose.msra.mxu0 0.0
    %137 = vmatprep.subr.mxu0 0.0
    %138 = vmatpush1.xpose.msra.mxu0 0.0
    %139 = vmatprep.subr.mxu0 0.0
    %140 = vmatpush1.xpose.msra.mxu0 0.0
    %141 = vmatprep.subr.mxu0 0.0
    %142 = vmatpush1.xpose.msra.mxu0 0.0
    %143 = vmatprep.subr.mxu0 0.0
    %144 = vmatpush1.xpose.msra.mxu0 0.0
    %145 = vmatprep.subr.mxu0 0.0
    %146 = vmatpush1.xpose.msra.mxu0 0.0
    %147 = vmatprep.subr.mxu0 0.0
    %148 = vmatpush1.xpose.msra.mxu0 0.0
    %149 = vmatprep.subr.mxu0 0.0
    %150 = vmatpush1.xpose.msra.mxu0 0.0
    %151 = vmatprep.subr.mxu0 0.0
    %152 = vmatpush1.xpose.msra.mxu0 %v118
    %153 = vmatprep.subr.mxu0 0.0
    %154 = vmatpush1.xpose.msra.mxu0 %v117
    %155 = vmatprep.subr.mxu0 0.0
    %156 = vmatpush2.xpose.msra.mxu0 0.0
    %157 = vmatprep.subr.mxu0 0.0
    %158 = vmatpush2.xpose.msra.mxu0 0.0
    %159 = vmatprep.subr.mxu0 0.0
    %160 = vmatpush2.xpose.msra.mxu0 0.0
    %161 = vmatprep.subr.mxu0 0.0
    %162 = vmatpush2.xpose.msra.mxu0 0.0
    %163 = vmatprep.subr.mxu0 0.0
    %164 = vmatpush2.xpose.msra.mxu0 0.0
    %165 = vmatprep.subr.mxu0 0.0
    %166 = vmatpush2.xpose.msra.mxu0 0.0
    %167 = vmatprep.subr.mxu0 0.0
    %168 = vmatpush2.xpose.msra.mxu0 0.0
    %169 = vmatprep.subr.mxu0 0.0
    %170 = vmatpush2.xpose.msra.mxu0 0.0
    %171 = vmatprep.subr.mxu0 0.0
    %172 = vmatpush2.xpose.msra.mxu0 0.0
    %173 = vmatprep.subr.mxu0 0.0
    %174 = vmatpush2.xpose.msra.mxu0 0.0
    %175 = vmatprep.subr.mxu0 0.0
    %176 = vmatpush2.xpose.msra.mxu0 0.0
    %177 = vmatprep.subr.mxu0 0.0
    %178 = vmatpush2.xpose.msra.mxu0 0.0
    %179 = vmatprep.subr.mxu0 0.0
    %180 = vmatpush2.xpose.msra.mxu0 0.0
    %181 = vmatprep.subr.mxu0 0.0
    %182 = vmatpush2.xpose.msra.mxu0 0.0
    %183 = vmatprep.subr.mxu0 0.0
    %184 = vmatpush2.xpose.msra.mxu0 0.0
    %185 = vmatprep.subr.mxu0 0.0
    %186 = vmatpush2.xpose.msra.mxu0 0.0
    %187 = vmatprep.mubr.f32.mxu0 0.0
    %188 = vmatmul.mubr.f32.gmra.mxu0 1.0
    %v189 = vpop.f32.mrf.mxu0
    %v190 = vadd.f32 0.0, %v189
    %v191 = vpop.f32.mrf.mxu0
    %192 = vdwg.mxu0
    %v193 = vlaneseq
    %v194 = vshrl.u32 %v193, 7
    %v195 = vsub.s32 0, %v194
    %v196 = vrot.slane %v190, %v195
    %v197 = vadd.f32 %v120, %v196
    %v198 = vadd.f32 %v122, %v196
    %v199 = vmul.f32 %v109, 2.0
    %v200 = vmul.f32 %v114, 2.0
    %v201 = vsub.f32 %v197, %v199
    %v202 = vsub.f32 %v198, %v200
    %v203 = vmax.f32 %v201, 0.0
    %v204 = vmax.f32 %v202, 0.0
    %v205 = vadd.f32 %v120, %v122
    %v206 = vrot.slane %v205, 4
    %v207 = vadd.f32 %v205, %v206
    %v208 = vrot.slane %v207, 2
    %v209 = vadd.f32 %v207, %v208
    %v210 = vrot.slane %v209, 1
    %v211 = vadd.f32 %v209, %v210
    %v212 = vadd.f32 %v40, %v41
    %v213 = vrot.slane %v212, 4
    %v214 = vadd.f32 %v212, %v213
    %v215 = vrot.slane %v214, 2
    %v216 = vadd.f32 %v214, %v215
    %v217 = vrot.slane %v216, 1
    %v218 = vadd.f32 %v216, %v217
    %v219 = vmul.f32 %v218, %v218
    %220 = vadd.xlane.f32.xlu0 %v219
    %v221 = vpop.xlane.xlu0 %220
    %v222 = vmul.f32 %v211, 32.0
    %v223 = vmul.f32 %v221, 2.0
    %v224 = vsub.f32 %v222, %v223
    %v225 = vmul.f32 %v224, 0.004166667
    %v226 = vmul.f32 %v225, 0.25
    %v227 = vrcp.pop %v226
    %v228 = vmul.f32 -1.0, %v227
    %v229 = vmul.f32 %v203, %v228
    %v230 = vmul.f32 %v204, %v228
    %v231 = vmul.f32 %v229, 1.442695
    %v232 = vpow.pop %v231
    %v233 = vmul.f32 %v230, 1.442695
    %v234 = vpow.pop %v233
    %v235 = vmul.f32 %v229, 0.5
    %v236 = vmul.f32 %v230, 0.5
    %v237 = vmul.f32 %v235, 1.442695
    %v238 = vpow.pop %v237
    %v239 = vmul.f32 %v236, 1.442695
    %v240 = vpow.pop %v239
    %v241 = vadd.f32 %v232, %v238
    %v242 = vadd.f32 %v234, %v240
    %v243 = vmul.f32 %v229, 0.25
    %v244 = vmul.f32 %v230, 0.25
    %v245 = vmul.f32 %v243, 1.442695
    %v246 = vpow.pop %v245
    %v247 = vmul.f32 %v244, 1.442695
    %v248 = vpow.pop %v247
    %v249 = vadd.f32 %v241, %v246
    %v250 = vadd.f32 %v242, %v248
    %v251 = vmul.f32 %v229, 0.125
    %v252 = vmul.f32 %v230, 0.125
    %v253 = vmul.f32 %v251, 1.442695
    %v254 = vpow.pop %v253
    %v255 = vmul.f32 %v252, 1.442695
    %v256 = vpow.pop %v255
    %v257 = vadd.f32 %v249, %v254
    %v258 = vadd.f32 %v250, %v256
    %v259 = vmul.f32 %v229, 0.0625
    %v260 = vmul.f32 %v230, 0.0625
    %v261 = vmul.f32 %v259, 1.442695
    %v262 = vpow.pop %v261
    %v263 = vmul.f32 %v260, 1.442695
    %v264 = vpow.pop %v263
    %v265 = vadd.f32 %v257, %v262
    %v266 = vadd.f32 %v258, %v264
    %v267 = vlaneseq
    %v268 = vshrl.u32 %v267, 7
    %v269 = vadd.s32 %v268, 8
    %vm270 = vcmp.lt.s32.totalorder %v268, 8
    %vm271 = vcmp.lt.s32.totalorder %v269, 8
    %v272 = vsel %vm270, 1.0, -1.0
    %v273 = vsel %vm271, 1.0, -1.0
    %v274 = vlaneseq
    %v275 = vand.u32 %v274, 127
    %vm276 = vcmp.lt.s32.totalorder %v275, 8
    %v277 = vsel %vm276, 1.0, -1.0
    %v278 = vmul.f32 %v265, %v277
    %v279 = vmul.f32 %v266, %v277
    %v280 = vmul.f32 %v278, %v272
    %v281 = vmul.f32 %v279, %v273
    %vm282 = vcmask 130048
    %v283 = vsel %vm282, %v280, 0.0
    %284 = vadd.xlane.f32.xlu0 %v283
    %v285 = vpop.xlane.xlu0 %284
    %v286 = vsel %vm282, %v281, 0.0
    %287 = vadd.xlane.f32.xlu0 %v286
    %v288 = vpop.xlane.xlu0 %287
    %v289 = vadd.f32 %v285, %v288
    %v290 = vrot.slane %v289, 4
    %v291 = vadd.f32 %v289, %v290
    %v292 = vrot.slane %v291, 2
    %v293 = vadd.f32 %v291, %v292
    %v294 = vrot.slane %v293, 1
    %v295 = vadd.f32 %v293, %v294
    %v296 = vmul.f32 %v295, 0.015625
    %vm297 = vcmask 0
    %298 = vst.msk [vmem:[#allocation8] sm:$0x1] %vm297, %v296
    // Predicated region
    $region18: #{tpu_custom_call.1} parent=1 // pred_check
      _
    $region19: #{tpu_custom_call.1} parent=1 // pred_check_branch
      %300 = sbr.rel (0) target = $region21
    $region20: #{tpu_custom_call.1} parent=1 // pred_region
      %s302 = ssub.s32 16, 16
      %303 = vsyncadd [#allocation5], %s302
      %s305 = sshll.u32 [#allocation8], 4
      %s306 = int_to_ptr.vmem [resolvable:$true] %s305
      %308 = dma.vmem_to_hbm [thread:$0]  %s306, 16, %s2, [#allocation5]
    $region21: #{tpu_custom_call.1} parent=1 // pred_fallthru
      _
    // Predicated region
    $region22: #{tpu_custom_call.1} parent=1 // pred_check
      _
    $region23: #{tpu_custom_call.1} parent=1 // pred_check_branch
      %310 = sbr.rel (0) target = $region25
    $region24: #{tpu_custom_call.1} parent=1 // pred_region
      %311 = dma.done [#allocation5], 16
    $region25: #{tpu_custom_call.1} parent=1 // pred_fallthru
      _
    %312 = vsyncpa [#allocation4], 1
    %313 = vsyncpa [#allocation7], 1
    %314 = vsyncpa [#allocation5], 1

</llo_original>
